<compile_context>
chip_gen: v6e
topology: v6e:2x2x1
jax: 0.10.0
libtpu: 0.0.40
codegen_flags: <defaults>
</compile_context>

<pallas_src>
import functools
import math

import jax
import jax.numpy as jnp
from jax.experimental import pallas as pl
from jax.experimental.pallas import tpu as pltpu


# ----------------------------- Pallas kernel -------------------------------
def _diffusion_embedding_kernel(*refs, do_lerp: bool):
    """Fused: one-hot/lerp gather (MXU) + Linear(128->512) + SiLU
                + Linear(512->512, column-blocked) + SiLU.

    Refs (do_lerp=True):  low, high, frac, emb, w1, b1, w2_blk, b2_blk, out_blk, h_scr
    Refs (do_lerp=False): low,              emb, w1, b1, w2_blk, b2_blk, out_blk, h_scr

    low/high : (bs_pad, 1) int32 VMEM     frac : (bs_pad, 1) f32 VMEM
    emb      : (max_steps, 128) f32 VMEM  (whole table, DMA'd once)
    w1       : (128, 512) bf16 VMEM       b1 : (1, 512) f32 VMEM
    w2_blk   : (512, tn) bf16 VMEM        b2_blk : (1, tn) f32 VMEM
    h_scr    : (bs_pad, 512) bf16 VMEM scratch (persists across column blocks)
    """
    if do_lerp:
        (low_ref, high_ref, frac_ref, emb_ref,
         w1_ref, b1_ref, w2_ref, b2_ref, o_ref, h_scr) = refs
    else:
        (low_ref, emb_ref,
         w1_ref, b1_ref, w2_ref, b2_ref, o_ref, h_scr) = refs

    j = pl.program_id(0)

    # First grid step only: gather/lerp + first projection + SiLU into scratch.
    @pl.when(j == 0)
    def _():
        bs_pad = h_scr.shape[0]
        max_steps = emb_ref.shape[0]

        # One-hot / lerp-weight matrix, built purely on the VPU from a lane iota.
        col = jax.lax.broadcasted_iota(jnp.int32, (bs_pad, max_steps), 1)
        low = low_ref[...]                                   # (bs_pad, 1) int32
        if do_lerp:
            high = high_ref[...]                             # (bs_pad, 1) int32
            frac = frac_ref[...]                             # (bs_pad, 1) f32
            # lerp convention matches torch: low=floor(t), high=ceil(t); at exact
            # integer t we have high==low and frac==0, so the two terms sum to 1.
            onehot = (jnp.where(col == low, 1.0 - frac, 0.0)
                      + jnp.where(col == high, frac, 0.0))    # (bs_pad, max_steps)
        else:
            onehot = (col == low).astype(jnp.float32)         # exact 0/1 weights

        # Gather/lerp as a tiny f32 matmul against the resident table (MXU).
        x = jnp.dot(onehot.astype(jnp.float32), emb_ref[...],
                    preferred_element_type=jnp.float32)       # (bs_pad, 128) f32

        # Linear 1 (bf16 weights, f32 accumulation) + SiLU in f32.
        h = jnp.dot(x.astype(jnp.bfloat16), w1_ref[...],
                    preferred_element_type=jnp.float32)       # (bs_pad, 512)
        h = h + b1_ref[...]
        h = h * jax.nn.sigmoid(h)
        # Cast once for the second (bf16) matmul; reused by every column block.
        h_scr[...] = h.astype(jnp.bfloat16)

    # Every grid step: one column block of Linear 2 + SiLU.
    y = jnp.dot(h_scr[...], w2_ref[...],
                preferred_element_type=jnp.float32)           # (bs_pad, tn)
    y = y + b2_ref[...]
    y = y * jax.nn.sigmoid(y)
    o_ref[...] = y.astype(o_ref.dtype)


def _diffusion_embedding_call(low, high, frac, embedding, w1, b1, w2, b2,
                              *, do_lerp: bool, n_col_blocks: int = 2,
                              out_dtype=jnp.float32):
    """pallas_call with a small grid over w2/b2/out column blocks.

    n_col_blocks=2 (256-wide blocks) overlaps the w2 DMA with compute on v5e/v6e;
    use n_col_blocks=1 on v7x (single grid step, no split).
    """
    bs_pad = low.shape[0]
    max_steps = embedding.shape[0]
    hidden = w1.shape[1]              # 512
    out_dim = w2.shape[1]             # 512
    assert out_dim % n_col_blocks == 0
    tn = out_dim // n_col_blocks
    assert tn % 128 == 0

    const = lambda j: (0, 0)          # fetched once (block index never changes)

    in_specs = [pl.BlockSpec((bs_pad, 1), const)]             # low indices
    inputs = [low]
    if do_lerp:
        in_specs += [pl.BlockSpec((bs_pad, 1), const),        # high indices
                     pl.BlockSpec((bs_pad, 1), const)]        # lerp fractions
        inputs += [high, frac]
    in_specs += [
        pl.BlockSpec((max_steps, 128), const),                # embedding table
        pl.BlockSpec((128, hidden), const),                   # w1 (bf16)
        pl.BlockSpec((1, hidden), const),                     # b1
        pl.BlockSpec((hidden, tn), lambda j: (0, j)),         # w2 column block (bf16)
        pl.BlockSpec((1, tn), lambda j: (0, j)),              # b2 column block
    ]
    inputs += [embedding, w1, b1, w2, b2]

    kernel = functools.partial(_diffusion_embedding_kernel, do_lerp=do_lerp)
    return pl.pallas_call(
        kernel,
        out_shape=jax.ShapeDtypeStruct((bs_pad, out_dim), out_dtype),
        grid_spec=pltpu.PrefetchScalarGridSpec(
            num_scalar_prefetch=0,
            grid=(n_col_blocks,),
            in_specs=in_specs,
            out_specs=pl.BlockSpec((bs_pad, tn), lambda j: (0, j)),
            scratch_shapes=[pltpu.VMEM((bs_pad, hidden), jnp.bfloat16)],
        ),
        compiler_params=pltpu.CompilerParams(
            dimension_semantics=("arbitrary",),
        ),
    )(*inputs)


# ------------------------------- glue (JAX) --------------------------------
def build_embedding(max_steps: int) -> jnp.ndarray:
    """Matches DiffusionEmbedding._build_embedding: (max_steps, 128) table."""
    steps = jnp.arange(max_steps, dtype=jnp.float32)[:, None]           # (T, 1)
    dims = jnp.arange(64, dtype=jnp.float32)[None, :]                   # (1, 64)
    table = steps * 10.0 ** (dims * 4.0 / 63.0)                         # (T, 64)
    return jnp.concatenate([jnp.sin(table), jnp.cos(table)], axis=1)    # (T, 128)


def init_params(key):
    """torch.nn.Linear-style init: U(-1/sqrt(fan_in), 1/sqrt(fan_in)).
    Weights stored bf16 (halves the dominant weight DMA); biases kept f32."""
    k1, k2, k3, k4 = jax.random.split(key, 4)
    b1_bound = 1.0 / math.sqrt(128.0)
    b2_bound = 1.0 / math.sqrt(512.0)
    w1 = jax.random.uniform(k1, (128, 512), jnp.float32, -b1_bound, b1_bound)
    b1 = jax.random.uniform(k2, (1, 512), jnp.float32, -b1_bound, b1_bound)
    w2 = jax.random.uniform(k3, (512, 512), jnp.float32, -b2_bound, b2_bound)
    b2 = jax.random.uniform(k4, (1, 512), jnp.float32, -b2_bound, b2_bound)
    return w1.astype(jnp.bfloat16), b1, w2.astype(jnp.bfloat16), b2


def diffusion_embedding_forward(diffusion_step, embedding, w1, b1, w2, b2,
                                *, n_col_blocks: int = 2):
    """Full forward.  Integer steps: direct one-hot gather (trace-time specialized).
    Float steps: lerp between floor/ceil rows (indices clipped to the table).
    Batch may hold many timesteps at once -- that is the cheapest way to amortize
    the weight DMA across diffusion steps."""
    bs = diffusion_step.shape[0]
    max_steps = embedding.shape[0]
    do_lerp = not jnp.issubdtype(diffusion_step.dtype, jnp.integer)

    if do_lerp:
        t = diffusion_step.astype(jnp.float32)
        floor_t = jnp.floor(t)
        low = jnp.clip(floor_t, 0, max_steps - 1).astype(jnp.int32)
        high = jnp.clip(jnp.ceil(t), 0, max_steps - 1).astype(jnp.int32)
        frac = t - floor_t
    else:
        # Clip defensively (matches valid-input torch behavior; avoids surprises).
        low = jnp.clip(diffusion_step.astype(jnp.int32), 0, max_steps - 1)
        high = None
        frac = None

    # Pad batch to a multiple of 8 so the kernel works on full (8,128) vregs.
    bs_pad = ((bs + 7) // 8) * 8
    pad = bs_pad - bs
    low = jnp.pad(low, (0, pad)).reshape(bs_pad, 1)
    if do_lerp:
        high = jnp.pad(high, (0, pad)).reshape(bs_pad, 1)
        frac = jnp.pad(frac, (0, pad)).reshape(bs_pad, 1)

    out = _diffusion_embedding_call(low, high, frac, embedding, w1, b1, w2, b2,
                                    do_lerp=do_lerp, n_col_blocks=n_col_blocks)
    return out[:bs]


# ------------------------------ references ---------------------------------
def _ref_embed(diffusion_step, embedding):
    """Gather / lerp exactly as the torch module does."""
    max_steps = embedding.shape[0]
    if jnp.issubdtype(diffusion_step.dtype, jnp.integer):
        return embedding[jnp.clip(diffusion_step, 0, max_steps - 1)]
    t = diffusion_step.astype(jnp.float32)
    floor_t = jnp.floor(t)
    low = jnp.clip(floor_t, 0, max_steps - 1).astype(jnp.int32)
    high = jnp.clip(jnp.ceil(t), 0, max_steps - 1).astype(jnp.int32)
    lo, hi = embedding[low], embedding[high]
    return lo + (hi - lo) * (t - floor_t)[:, None]


def _reference_forward_bf16(diffusion_step, embedding, w1, b1, w2, b2):
    """Pure-JAX reference mirroring the kernel's precision (bf16 matmuls, f32 acc)."""
    x = _ref_embed(diffusion_step, embedding)
    h = jnp.dot(x.astype(jnp.bfloat16), w1, preferred_element_type=jnp.float32) + b1
    h = h * jax.nn.sigmoid(h)
    y = jnp.dot(h.astype(jnp.bfloat16), w2, preferred_element_type=jnp.float32) + b2
    return y * jax.nn.sigmoid(y)


def _reference_forward_f32(diffusion_step, embedding, w1, b1, w2, b2):
    """Full-f32 reference matching the original torch module's math."""
    x = _ref_embed(diffusion_step, embedding)
    h = x @ w1.astype(jnp.float32) + b1
    h = h * jax.nn.sigmoid(h)
    y = h @ w2.astype(jnp.float32) + b2
    return y * jax.nn.sigmoid(y)


# --------------------------------- main -------------------------------------
if __name__ == "__main__":
    key = jax.random.PRNGKey(0)
    k_params, k_int, k_flt = jax.random.split(key, 3)

    max_steps = 50
    batch = 2

    embedding = build_embedding(max_steps)                              # (50, 128) f32
    w1, b1, w2, b2 = init_params(k_params)

    # ---- integer diffusion steps (like torch.randint(50, (bs,))) -------------
    steps_int = jax.random.randint(k_int, (batch,), 0, max_steps, jnp.int32)
    out_int = diffusion_embedding_forward(steps_int, embedding, w1, b1, w2, b2,
                                          n_col_blocks=2)               # v5e/v6e config
    out_int = jax.block_until_ready(out_int)
    assert out_int.shape == (batch, 512), out_int.shape

    ref_bf16 = _reference_forward_bf16(steps_int, embedding, w1, b1, w2, b2)
    assert jnp.allclose(out_int, ref_bf16, atol=1e-3, rtol=1e-3)
    ref_f32 = _reference_forward_f32(steps_int, embedding, w1, b1, w2, b2)
    assert jnp.allclose(out_int, ref_f32, atol=5e-2, rtol=5e-2)

    # ---- float diffusion steps (lerp path), single grid step (v7x config) ----
    steps_flt = jax.random.uniform(k_flt, (3,), jnp.float32, 0.0, max_steps - 1.0)
    out_flt = diffusion_embedding_forward(steps_flt, embedding, w1, b1, w2, b2,
                                          n_col_blocks=1)
    out_flt = jax.block_until_ready(out_flt)
    assert out_flt.shape == (3, 512), out_flt.shape

    ref_bf16_f = _reference_forward_bf16(steps_flt, embedding, w1, b1, w2, b2)
    assert jnp.allclose(out_flt, ref_bf16_f, atol=1e-3, rtol=1e-3)
    ref_f32_f = _reference_forward_f32(steps_flt, embedding, w1, b1, w2, b2)
    assert jnp.allclose(out_flt, ref_f32_f, atol=5e-2, rtol=5e-2)

    print("KERNEL_OK")
</pallas_src>

<mosaic_0001>
module attributes {stable_mosaic.version = 11 : i64} {
  func.func @_diffusion_embedding_kernel(%arg0: i32, %arg1: memref<8x1xi32, #tpu.memory_space<vmem>>, %arg2: memref<50x128xf32, #tpu.memory_space<vmem>>, %arg3: memref<128x512xbf16, #tpu.memory_space<vmem>>, %arg4: memref<1x512xf32, #tpu.memory_space<vmem>>, %arg5: memref<512x256xbf16, #tpu.memory_space<vmem>>, %arg6: memref<1x256xf32, #tpu.memory_space<vmem>>, %arg7: memref<8x256xf32, #tpu.memory_space<vmem>>, %arg8: memref<8x512xbf16, #tpu.memory_space<vmem>>) attributes {dimension_semantics = [#tpu.dimension_semantics<arbitrary>], iteration_bounds = array<i64: 2>, scalar_prefetch = 0 : i64, scratch_operands = 1 : i64, tpu.core_type = #tpu.core_type<tc>, window_params = [{pipeline_mode = #tpu.pipeline_mode<synchronous>, transform_indices = @transform_0, window_bounds = array<i64: 8, 1>}, {pipeline_mode = #tpu.pipeline_mode<synchronous>, transform_indices = @transform_1, window_bounds = array<i64: 50, 128>}, {pipeline_mode = #tpu.pipeline_mode<synchronous>, transform_indices = @transform_2, window_bounds = array<i64: 128, 512>}, {pipeline_mode = #tpu.pipeline_mode<synchronous>, transform_indices = @transform_3, window_bounds = array<i64: 1, 512>}, {transform_indices = @transform_4, window_bounds = array<i64: 512, 256>}, {transform_indices = @transform_5, window_bounds = array<i64: 1, 256>}, {transform_indices = @transform_6, window_bounds = array<i64: 8, 256>}]} {
    %c0_i32 = arith.constant 0 : i32
    %0 = arith.cmpi eq, %arg0, %c0_i32 : i32
    %1 = arith.extui %0 : i1 to i32
    %c0_i32_0 = arith.constant 0 : i32
    %2 = arith.cmpi ne, %1, %c0_i32_0 : i32
    scf.if %2 {
      %16 = tpu.iota {dimensions = array<i32: 1>} : vector<8x50xi32>
      %c0_9 = arith.constant 0 : index
      %c0_10 = arith.constant 0 : index
      %17 = vector.load %arg1[%c0_9, %c0_10] : memref<8x1xi32, #tpu.memory_space<vmem>>, vector<8x1xi32>
      %18 = vector.broadcast %17 : vector<8x1xi32> to vector<8x50xi32>
      %19 = arith.cmpi eq, %16, %18 : vector<8x50xi32>
      %20 = arith.extui %19 : vector<8x50xi1> to vector<8x50xi32>
      %21 = arith.sitofp %20 : vector<8x50xi32> to vector<8x50xf32>
      %c0_11 = arith.constant 0 : index
      %c0_12 = arith.constant 0 : index
      %22 = vector.load %arg2[%c0_11, %c0_12] : memref<50x128xf32, #tpu.memory_space<vmem>>, vector<50x128xf32>
      %cst_13 = arith.constant dense<0.000000e+00> : vector<8x128xf32>
      %23 = tpu.matmul %21, %22, %cst_13 {dimension_numbers = #tpu.dot_dimension_numbers<[1], [0], [0], [1], [0, 0, 1, 1], [], []>} : vector<8x50xf32>, vector<50x128xf32>, vector<8x128xf32> -> vector<8x128xf32>
      %24 = arith.truncf %23 : vector<8x128xf32> to vector<8x128xbf16>
      %c0_14 = arith.constant 0 : index
      %c0_15 = arith.constant 0 : index
      %25 = vector.load %arg3[%c0_14, %c0_15] : memref<128x512xbf16, #tpu.memory_space<vmem>>, vector<128x512xbf16>
      %cst_16 = arith.constant dense<0.000000e+00> : vector<8x512xf32>
      %26 = tpu.matmul %24, %25, %cst_16 {dimension_numbers = #tpu.dot_dimension_numbers<[1], [0], [0], [1], [0, 0, 1, 1], [], []>} : vector<8x128xbf16>, vector<128x512xbf16>, vector<8x512xf32> -> vector<8x512xf32>
      %c0_17 = arith.constant 0 : index
      %c0_18 = arith.constant 0 : index
      %27 = vector.load %arg4[%c0_17, %c0_18] : memref<1x512xf32, #tpu.memory_space<vmem>>, vector<1x512xf32>
      %28 = vector.broadcast %27 : vector<1x512xf32> to vector<8x512xf32>
      %29 = arith.addf %26, %28 : vector<8x512xf32>
      %30 = arith.negf %29 : vector<8x512xf32>
      %31 = math.exp %30 : vector<8x512xf32>
      %cst_19 = arith.constant 1.000000e+00 : f32
      %32 = vector.broadcast %cst_19 : f32 to vector<8x512xf32>
      %33 = arith.addf %32, %31 : vector<8x512xf32>
      %34 = arith.divf %32, %33 : vector<8x512xf32>
      %35 = arith.mulf %29, %34 : vector<8x512xf32>
      %36 = arith.truncf %35 : vector<8x512xf32> to vector<8x512xbf16>
      %c0_20 = arith.constant 0 : index
      %c0_21 = arith.constant 0 : index
      %37 = vector.load %arg8[%c0_20, %c0_21] : memref<8x512xbf16, #tpu.memory_space<vmem>>, vector<8x512xbf16>
      tpu.vector_store %arg8[%c0_20, %c0_21], %36 {strides = array<i32>} : memref<8x512xbf16, #tpu.memory_space<vmem>>, vector<8x512xbf16>,
    } else {
    }
    %c0 = arith.constant 0 : index
    %c0_1 = arith.constant 0 : index
    %3 = vector.load %arg8[%c0, %c0_1] : memref<8x512xbf16, #tpu.memory_space<vmem>>, vector<8x512xbf16>
    %c0_2 = arith.constant 0 : index
    %c0_3 = arith.constant 0 : index
    %4 = vector.load %arg5[%c0_2, %c0_3] : memref<512x256xbf16, #tpu.memory_space<vmem>>, vector<512x256xbf16>
    %cst = arith.constant dense<0.000000e+00> : vector<8x256xf32>
    %5 = tpu.matmul %3, %4, %cst {dimension_numbers = #tpu.dot_dimension_numbers<[1], [0], [0], [1], [0, 0, 1, 1], [], []>} : vector<8x512xbf16>, vector<512x256xbf16>, vector<8x256xf32> -> vector<8x256xf32>
    %c0_4 = arith.constant 0 : index
    %c0_5 = arith.constant 0 : index
    %6 = vector.load %arg6[%c0_4, %c0_5] : memref<1x256xf32, #tpu.memory_space<vmem>>, vector<1x256xf32>
    %7 = vector.broadcast %6 : vector<1x256xf32> to vector<8x256xf32>
    %8 = arith.addf %5, %7 : vector<8x256xf32>
    %9 = arith.negf %8 : vector<8x256xf32>
    %10 = math.exp %9 : vector<8x256xf32>
    %cst_6 = arith.constant 1.000000e+00 : f32
    %11 = vector.broadcast %cst_6 : f32 to vector<8x256xf32>
    %12 = arith.addf %11, %10 : vector<8x256xf32>
    %13 = arith.divf %11, %12 : vector<8x256xf32>
    %14 = arith.mulf %8, %13 : vector<8x256xf32>
    %c0_7 = arith.constant 0 : index
    %c0_8 = arith.constant 0 : index
    %15 = vector.load %arg7[%c0_7, %c0_8] : memref<8x256xf32, #tpu.memory_space<vmem>>, vector<8x256xf32>
    tpu.vector_store %arg7[%c0_7, %c0_8], %14 {strides = array<i32>} : memref<8x256xf32, #tpu.memory_space<vmem>>, vector<8x256xf32>,
    return
  }
  func.func @transform_0(%arg0: i32) -> (i32, i32) {
    %c0_i32 = arith.constant 0 : i32
    %c0_i32_0 = arith.constant 0 : i32
    %c0_i32_1 = arith.constant 0 : i32
    return %c0_i32, %c0_i32_0 : i32, i32
  }
  func.func @transform_1(%arg0: i32) -> (i32, i32) {
    %c0_i32 = arith.constant 0 : i32
    %c0_i32_0 = arith.constant 0 : i32
    %c0_i32_1 = arith.constant 0 : i32
    return %c0_i32, %c0_i32_0 : i32, i32
  }
  func.func @transform_2(%arg0: i32) -> (i32, i32) {
    %c0_i32 = arith.constant 0 : i32
    %c0_i32_0 = arith.constant 0 : i32
    %c0_i32_1 = arith.constant 0 : i32
    return %c0_i32, %c0_i32_0 : i32, i32
  }
  func.func @transform_3(%arg0: i32) -> (i32, i32) {
    %c0_i32 = arith.constant 0 : i32
    %c0_i32_0 = arith.constant 0 : i32
    %c0_i32_1 = arith.constant 0 : i32
    return %c0_i32, %c0_i32_0 : i32, i32
  }
  func.func @transform_4(%arg0: i32) -> (i32, i32) {
    %c0_i32 = arith.constant 0 : i32
    %c0_i32_0 = arith.constant 0 : i32
    return %c0_i32, %arg0 : i32, i32
  }
  func.func @transform_5(%arg0: i32) -> (i32, i32) {
    %c0_i32 = arith.constant 0 : i32
    %c0_i32_0 = arith.constant 0 : i32
    return %c0_i32, %arg0 : i32, i32
  }
  func.func @transform_6(%arg0: i32) -> (i32, i32) {
    %c0_i32 = arith.constant 0 : i32
    %c0_i32_0 = arith.constant 0 : i32
    return %c0_i32, %arg0 : i32, i32
  }
}

</mosaic_0001>

<llo_original>
// kernel: tpu_custom_call.1
$region0: #{tpu_custom_call.1}
  #allocation0 [shape = 'u32[]', space=smem, size = 0x4, offset = 0x4, fixed_abs, tag = 'smem constant byte address 0x4 - core index']
  #allocation1 [shape = 'u32[144,128]{1,0:T(1,128)}', space=vmem, size = 0x12000, scoped, tag = 'internal scratch']
  #allocation2 [shape = 'bf16[8,512]{1,0:T(8,128)(2,1)}', space=vmem, size = 0x2000, scoped, tag = 'scratch operand']
  %s0 = inlined_call_operand.vmem [shape: s32[8,1], index: 0, kind: input, shape index: {}]
  %s1 = inlined_call_operand.hbm [shape: f32[50,128], index: 1, kind: input, shape index: {}]
  %s2 = inlined_call_operand.hbm [shape: bf16[128,512], index: 2, kind: input, shape index: {}]
  %s3 = inlined_call_operand.vmem [shape: f32[1,512], index: 3, kind: input, shape index: {}]
  %s4 = inlined_call_operand.hbm [shape: bf16[512,512], index: 4, kind: input, shape index: {}]
  %s5 = inlined_call_operand.vmem [shape: f32[1,512], index: 5, kind: input, shape index: {}]
  %s6 = inlined_call_operand.hbm [shape: f32[8,512], index: 6, kind: output, shape index: {}]
  %s7 = sld [smem:[#allocation0]]
  $region73: #{tpu_custom_call.1} parent=0
    _
  %s9 = ssub.s32 1, %s7
  %s10 = scalar_select 0, %s9, %s7
  $region1: #{tpu_custom_call.1} parent=0
    #allocation3 [shape = 'u8[28672]{0}', space=vmem, size = 0x7000, scoped, tag = 'input window, operand 1, single buffered']
    #allocation4 [shape = 's32[2]{0}', space=sflag, size = 0x8, scoped, tag = 'scoped memory for tpu_custom_call.1']
    #allocation5 [shape = 's32[2]{0}', space=sflag, size = 0x8, scoped, tag = 'scoped memory for tpu_custom_call.1']
    #allocation6 [shape = 'u8[131072]{0}', space=vmem, size = 0x20000, scoped, tag = 'input window, operand 2, single buffered']
    #allocation7 [shape = 's32[1]{0}', space=sflag, size = 0x4, scoped, tag = 'scoped memory for tpu_custom_call.1']
    #allocation8 [shape = 'u8[524288]{0}', space=vmem, size = 0x80000, scoped, tag = 'input window, operand 4']
    #allocation9 [shape = 'u8[16384]{0}', space=vmem, size = 0x4000, scoped, tag = 'output window, operand 0']
    %11 = vsyncpa [#allocation4], 0
    %12 = vsyncpa [#allocation7], 0
    %13 = vsyncpa [#allocation5], 0
    %s14 = scalar_lea.sflag [#allocation5], 1
    %15 = vsyncpa %s14, 0
    loop: start=0, step=1, limit=4
    $region2: #{tpu_custom_call.1} parent=1 // loop_pre_header
      _
    $region3: #{tpu_custom_call.1} parent=1 // loop_header
      %s17 = sphi 0, %s21
      %p18 = scmp.ge.s32.totalorder %s17, 4
      %s25 = sphi 0, %s25
      %s27 = sphi 0, %s25
      %s28 = sphi 0, %s27
      %s42 = sphi 0, %s28
      %s46 = sphi 0, %s46
      %s48 = sphi 0, %s46
      %s49 = sphi 0, %s48
      %s63 = sphi 0, %s49
      %s67 = sphi 0, %s67
      %s69 = sphi 0, %s67
      %s70 = sphi 0, %s69
      %s84 = sphi 0, %s70
      %s88 = sphi 0, %s88
      %s90 = sphi 0, %s88
      %s91 = sphi 0, %s90
      %s105 = sphi 0, %s91
      %s111 = sphi 0, %s113
      %s114 = sphi 0, %s111
      %s115 = sphi 0, %s114
      %s131 = sphi 0, %s115
      %s137 = sphi 0, %s139
      %s140 = sphi 0, %s137
      %s141 = sphi 0, %s140
      %s157 = sphi 0, %s141
      %s163 = sphi 0, %s165
      %s166 = sphi 0, %s163
      %s167 = sphi 0, %s166
      %s183 = sphi 0, %s167
    $region4: #{tpu_custom_call.1} parent=1 // loop_header_branch
      %20 = sbr.rel (%p18) target = $region8
    $region5: #{tpu_custom_call.1} parent=1 // loop_body
      %s22 = ssub.s32 %s17, 1
      %s23 = ssub.s32 %s17, 2
      %s24 = sadd.s32 %s17, 1
      %s26 = sadd.s32 %s25, 1
      %p29 = scmp.eq.s32.totalorder %s17, 1
      %p30 = scmp.ne.s32.totalorder %s25, %s27
      %p31 = scmp.eq.s32.totalorder %s17, 0
      %p32 = por %p30, %p31
      %p33 = scmp.ne.s32.totalorder %s25, %s27
      %p34 = scmp.eq.s32.totalorder %s22, 1
      %p35 = por %p33, %p34
      %p36 = scmp.ne.s32.totalorder %s27, %s28
      %p37 = scmp.eq.s32.totalorder %s22, 0
      %p38 = por %p36, %p37
      %p39 = scmp.ne.s32.totalorder %s27, %s28
      %p40 = scmp.eq.s32.totalorder %s23, 1
      %p41 = por %p39, %p40
      %p43 = scmp.ne.s32.totalorder %s28, %s42
      %p44 = scmp.eq.s32.totalorder %s23, 0
      %p45 = por %p43, %p44
      %s47 = sadd.s32 %s46, 1
      %p50 = scmp.eq.s32.totalorder %s17, 1
      %p51 = scmp.ne.s32.totalorder %s46, %s48
      %p52 = scmp.eq.s32.totalorder %s17, 0
      %p53 = por %p51, %p52
      %p54 = scmp.ne.s32.totalorder %s46, %s48
      %p55 = scmp.eq.s32.totalorder %s22, 1
      %p56 = por %p54, %p55
      %p57 = scmp.ne.s32.totalorder %s48, %s49
      %p58 = scmp.eq.s32.totalorder %s22, 0
      %p59 = por %p57, %p58
      %p60 = scmp.ne.s32.totalorder %s48, %s49
      %p61 = scmp.eq.s32.totalorder %s23, 1
      %p62 = por %p60, %p61
      %p64 = scmp.ne.s32.totalorder %s49, %s63
      %p65 = scmp.eq.s32.totalorder %s23, 0
      %p66 = por %p64, %p65
      %s68 = sadd.s32 %s67, 1
      %p71 = scmp.eq.s32.totalorder %s17, 1
      %p72 = scmp.ne.s32.totalorder %s67, %s69
      %p73 = scmp.eq.s32.totalorder %s17, 0
      %p74 = por %p72, %p73
      %p75 = scmp.ne.s32.totalorder %s67, %s69
      %p76 = scmp.eq.s32.totalorder %s22, 1
      %p77 = por %p75, %p76
      %p78 = scmp.ne.s32.totalorder %s69, %s70
      %p79 = scmp.eq.s32.totalorder %s22, 0
      %p80 = por %p78, %p79
      %p81 = scmp.ne.s32.totalorder %s69, %s70
      %p82 = scmp.eq.s32.totalorder %s23, 1
      %p83 = por %p81, %p82
      %p85 = scmp.ne.s32.totalorder %s70, %s84
      %p86 = scmp.eq.s32.totalorder %s23, 0
      %p87 = por %p85, %p86
      %s89 = sadd.s32 %s88, 1
      %p92 = scmp.eq.s32.totalorder %s17, 1
      %p93 = scmp.ne.s32.totalorder %s88, %s90
      %p94 = scmp.eq.s32.totalorder %s17, 0
      %p95 = por %p93, %p94
      %p96 = scmp.ne.s32.totalorder %s88, %s90
      %p97 = scmp.eq.s32.totalorder %s22, 1
      %p98 = por %p96, %p97
      %p99 = scmp.ne.s32.totalorder %s90, %s91
      %p100 = scmp.eq.s32.totalorder %s22, 0
      %p101 = por %p99, %p100
      %p102 = scmp.ne.s32.totalorder %s90, %s91
      %p103 = scmp.eq.s32.totalorder %s23, 1
      %p104 = por %p102, %p103
      %p106 = scmp.ne.s32.totalorder %s91, %s105
      %p107 = scmp.eq.s32.totalorder %s23, 0
      %p108 = por %p106, %p107
      %s109 = ssub.s32 %s17, %s24
      %p110 = scmp.eq.s32.totalorder %s109, 0
      %s112 = sadd.s32 %s111, 1
      %s113 = scalar_select %p110, %s111, %s112
      %p116 = pneg %p110
      %p117 = scmp.eq.s32.totalorder %s17, 1
      %p118 = por %p116, %p117
      %p119 = scmp.ne.s32.totalorder %s111, %s114
      %p120 = scmp.eq.s32.totalorder %s17, 0
      %p121 = por %p119, %p120
      %p122 = scmp.ne.s32.totalorder %s111, %s114
      %p123 = scmp.eq.s32.totalorder %s22, 1
      %p124 = por %p122, %p123
      %p125 = scmp.ne.s32.totalorder %s114, %s115
      %p126 = scmp.eq.s32.totalorder %s22, 0
      %p127 = por %p125, %p126
      %p128 = scmp.ne.s32.totalorder %s114, %s115
      %p129 = scmp.eq.s32.totalorder %s23, 1
      %p130 = por %p128, %p129
      %p132 = scmp.ne.s32.totalorder %s115, %s131
      %p133 = scmp.eq.s32.totalorder %s23, 0
      %p134 = por %p132, %p133
      %s135 = ssub.s32 %s17, %s24
      %p136 = scmp.eq.s32.totalorder %s135, 0
      %s138 = sadd.s32 %s137, 1
      %s139 = scalar_select %p136, %s137, %s138
      %p142 = pneg %p136
      %p143 = scmp.eq.s32.totalorder %s17, 1
      %p144 = por %p142, %p143
      %p145 = scmp.ne.s32.totalorder %s137, %s140
      %p146 = scmp.eq.s32.totalorder %s17, 0
      %p147 = por %p145, %p146
      %p148 = scmp.ne.s32.totalorder %s137, %s140
      %p149 = scmp.eq.s32.totalorder %s22, 1
      %p150 = por %p148, %p149
      %p151 = scmp.ne.s32.totalorder %s140, %s141
      %p152 = scmp.eq.s32.totalorder %s22, 0
      %p153 = por %p151, %p152
      %p154 = scmp.ne.s32.totalorder %s140, %s141
      %p155 = scmp.eq.s32.totalorder %s23, 1
      %p156 = por %p154, %p155
      %p158 = scmp.ne.s32.totalorder %s141, %s157
      %p159 = scmp.eq.s32.totalorder %s23, 0
      %p160 = por %p158, %p159
      %s161 = ssub.s32 %s17, %s24
      %p162 = scmp.eq.s32.totalorder %s161, 0
      %s164 = sadd.s32 %s163, 1
      %s165 = scalar_select %p162, %s163, %s164
      %p168 = pneg %p162
      %p169 = scmp.eq.s32.totalorder %s17, 1
      %p170 = por %p168, %p169
      %p171 = scmp.ne.s32.totalorder %s163, %s166
      %p172 = scmp.eq.s32.totalorder %s17, 0
      %p173 = por %p171, %p172
      %p174 = scmp.ne.s32.totalorder %s163, %s166
      %p175 = scmp.eq.s32.totalorder %s22, 1
      %p176 = por %p174, %p175
      %p177 = scmp.ne.s32.totalorder %s166, %s167
      %p178 = scmp.eq.s32.totalorder %s22, 0
      %p179 = por %p177, %p178
      %p180 = scmp.ne.s32.totalorder %s166, %s167
      %p181 = scmp.eq.s32.totalorder %s23, 1
      %p182 = por %p180, %p181
      %p184 = scmp.ne.s32.totalorder %s167, %s183
      %p185 = scmp.eq.s32.totalorder %s23, 0
      %p186 = por %p184, %p185
      %p187 = scmp.le.s32.totalorder 1, %s17
      %p188 = scmp.lt.s32.totalorder %s17, 3
      %p189 = pnand %p187, %p188
      %p190 = pneg %p189
      // Predicated region
      $region9: #{tpu_custom_call.1} parent=5 // pred_check
        _
      $region10: #{tpu_custom_call.1} parent=5 // pred_check_branch
        %192 = sbr.rel (%p189) target = $region12
      $region11: #{tpu_custom_call.1} parent=5 // pred_region
        %s193 = ssub.s32 %s17, 1
        // Predicated region
        $region13: #{tpu_custom_call.1} parent=11 // pred_check
          %p194 = pneg %p38
        $region14: #{tpu_custom_call.1} parent=11 // pred_check_branch
          %196 = sbr.rel (%p194) target = $region16
        $region15: #{tpu_custom_call.1} parent=11 // pred_region
          _
        $region16: #{tpu_custom_call.1} parent=11 // pred_fallthru
          _
        // Predicated region
        $region17: #{tpu_custom_call.1} parent=11 // pred_check
          %p197 = pneg %p59
        $region18: #{tpu_custom_call.1} parent=11 // pred_check_branch
          %199 = sbr.rel (%p197) target = $region20
        $region19: #{tpu_custom_call.1} parent=11 // pred_region
          %s201 = ssub.s32 896, 896
          %202 = vsyncadd [#allocation4], %s201
          %s203 = sshll.u32 [#allocation3], 4
          %s204 = int_to_ptr.vmem [resolvable:$true] %s203
          %209 = dma.hbm_to_vmem [thread:$0]  %s1, 896, %s204, [#allocation4], 128, 128, 8
        $region20: #{tpu_custom_call.1} parent=11 // pred_fallthru
          _
        // Predicated region
        $region21: #{tpu_custom_call.1} parent=11 // pred_check
          %p210 = pneg %p80
        $region22: #{tpu_custom_call.1} parent=11 // pred_check_branch
          %212 = sbr.rel (%p210) target = $region24
        $region23: #{tpu_custom_call.1} parent=11 // pred_region
          %s214 = ssub.s32 4096, 4096
          %215 = vsyncadd [#allocation7], %s214
          %s216 = sshll.u32 [#allocation6], 4
          %s217 = int_to_ptr.vmem [resolvable:$true] %s216
          %222 = dma.hbm_to_vmem [thread:$0]  %s2, 4096, %s217, [#allocation7], 256, 256, 16
        $region24: #{tpu_custom_call.1} parent=11 // pred_fallthru
          _
        // Predicated region
        $region25: #{tpu_custom_call.1} parent=11 // pred_check
          %p223 = pneg %p101
        $region26: #{tpu_custom_call.1} parent=11 // pred_check_branch
          %225 = sbr.rel (%p223) target = $region28
        $region27: #{tpu_custom_call.1} parent=11 // pred_region
          _
        $region28: #{tpu_custom_call.1} parent=11 // pred_fallthru
          _
      $region12: #{tpu_custom_call.1} parent=5 // pred_fallthru
        _
      %p226 = scmp.lt.s32.totalorder %s17, 2
      // Predicated region
      $region29: #{tpu_custom_call.1} parent=5 // pred_check
        %p227 = pneg %p226
      $region30: #{tpu_custom_call.1} parent=5 // pred_check_branch
        %229 = sbr.rel (%p227) target = $region32
      $region31: #{tpu_custom_call.1} parent=5 // pred_region
        // Predicated region
        $region33: #{tpu_custom_call.1} parent=31 // pred_check
          %p230 = pneg %p121
        $region34: #{tpu_custom_call.1} parent=31 // pred_check_branch
          %232 = sbr.rel (%p230) target = $region36
        $region35: #{tpu_custom_call.1} parent=31 // pred_region
          %s233 = sand.u32 %s17, 1
          %s234 = scalar_lea.sflag [#allocation4], %s233
          %s235 = sand.u32 %s111, 1
          %s236 = smul.addr %s235, 512
          %s237 = scalar_lea.vmem [#allocation8], %s236
          %s238 = smul.u32 2, %s17
          %s240 = ssub.s32 8192, 8192
          %241 = vsyncadd %s234, %s240
          %s242 = smul.addr %s238, 64
          %s243 = scalar_lea.hbm %s4, %s242
          %s244 = sshll.u32 %s237, 4
          %s245 = int_to_ptr.vmem [resolvable:$true] %s244
          %250 = dma.hbm_to_vmem [thread:$0]  %s243, 8192, %s245, %s234, 256, 128, 8
        $region36: #{tpu_custom_call.1} parent=31 // pred_fallthru
          _
        // Predicated region
        $region37: #{tpu_custom_call.1} parent=31 // pred_check
          %p251 = pneg %p147
        $region38: #{tpu_custom_call.1} parent=31 // pred_check_branch
          %253 = sbr.rel (%p251) target = $region40
        $region39: #{tpu_custom_call.1} parent=31 // pred_region
          %s254 = smul.u32 2, %s17
          %p255 = scmp.lt.s32.totalorder %s254, 3
          %s256 = scalar_select %p255, %s254, 3
          %s257 = scalar_lea.vmem %s5, %s256
          %s258 = smul.u32 2, %s17
        $region40: #{tpu_custom_call.1} parent=31 // pred_fallthru
          _
      $region32: #{tpu_custom_call.1} parent=5 // pred_fallthru
        _
      %p259 = scmp.le.s32.totalorder 1, %s17
      %p260 = scmp.lt.s32.totalorder %s17, 3
      %p261 = pnand %p259, %p260
      %p262 = pneg %p261
      // Predicated region
      $region41: #{tpu_custom_call.1} parent=5 // pred_check
        _
      $region42: #{tpu_custom_call.1} parent=5 // pred_check_branch
        %264 = sbr.rel (%p261) target = $region44
      $region43: #{tpu_custom_call.1} parent=5 // pred_region
        %s265 = ssub.s32 %s17, 1
        // Predicated region
        $region45: #{tpu_custom_call.1} parent=43 // pred_check
          %p266 = pneg %p59
        $region46: #{tpu_custom_call.1} parent=43 // pred_check_branch
          %268 = sbr.rel (%p266) target = $region48
        $region47: #{tpu_custom_call.1} parent=43 // pred_region
          %269 = dma.done [#allocation4], 896
        $region48: #{tpu_custom_call.1} parent=43 // pred_fallthru
          _
        // Predicated region
        $region49: #{tpu_custom_call.1} parent=43 // pred_check
          %p270 = pneg %p80
        $region50: #{tpu_custom_call.1} parent=43 // pred_check_branch
          %272 = sbr.rel (%p270) target = $region52
        $region51: #{tpu_custom_call.1} parent=43 // pred_region
          %273 = dma.done [#allocation7], 4096
        $region52: #{tpu_custom_call.1} parent=43 // pred_fallthru
          _
        %s274 = sand.u32 %s22, 1
        %s275 = scalar_lea.sflag [#allocation4], %s274
        %s276 = sand.u32 %s114, 1
        %s277 = smul.addr %s276, 512
        %s278 = scalar_lea.vmem [#allocation8], %s277
        // Predicated region
        $region53: #{tpu_custom_call.1} parent=43 // pred_check
          %p279 = pneg %p127
        $region54: #{tpu_custom_call.1} parent=43 // pred_check_branch
          %281 = sbr.rel (%p279) target = $region56
        $region55: #{tpu_custom_call.1} parent=43 // pred_region
          %282 = dma.done %s275, 8192
        $region56: #{tpu_custom_call.1} parent=43 // pred_fallthru
          _
        %p283 = pneg %p38
        %p284 = pneg %p35
        %p285 = pneg %p59
        %p286 = pneg %p56
        %p287 = pneg %p80
        %p288 = pneg %p77
        %p289 = pneg %p101
        %p290 = pneg %p98
        %s291 = sand.u32 %s22, 1
        %s292 = scalar_lea.sflag [#allocation4], %s291
        %s293 = sand.u32 %s114, 1
        %s294 = smul.addr %s293, 512
        %s295 = scalar_lea.vmem [#allocation8], %s294
        %p296 = pneg %p127
        %p297 = pneg %p124
        %s298 = smul.u32 2, %s22
        %p299 = scmp.lt.s32.totalorder %s298, 3
        %s300 = scalar_select %p299, %s298, 3
        %s301 = scalar_lea.vmem %s5, %s300
        %p302 = pneg %p153
        %p303 = pneg %p150
        %p304 = pneg %p179
        %p305 = pneg %p176
        %s306 = sand.u32 %s166, 1
        %s307 = scalar_lea.sflag [#allocation5], %s306
        %s308 = sand.u32 %s166, 1
        %s309 = smul.addr %s308, 16
        %s310 = scalar_lea.vmem [#allocation9], %s309
        %s311 = smul.u32 2, %s22
        %s312 = smul.u32 2, %s22
        %p313 = scmp.lt.s32.totalorder %s312, 3
        %s314 = scalar_select %p313, %s312, 3
        %s315 = scalar_lea.vmem %s5, %s314
        %s316 = smul.u32 2, %s22
        %s317 = smul.u32 2, %s22
        %p319 = scmp.eq.s32.totalorder %s22, 0
        // Predicated region
        $region57: #{tpu_custom_call.1} parent=43 // pred_check
          %p320 = pneg %p319
        $region58: #{tpu_custom_call.1} parent=43 // pred_check_branch
          %322 = sbr.rel (%p320) target = $region60
        $region59: #{tpu_custom_call.1} parent=43 // pred_region
          %v323 = vlaneseq
          %v324 = vand.u32 %v323, 127
          %v325 = vld [vmem:[%s0] sm:$0xff]
          %326 = vset.pattern.permute.xlu0 0
          %327 = vperm.xlu0 %326, %v325
          %v328 = vpop.permute.xlu0 %327
          %vm329 = vcmp.eq.s32.totalorder %v324, %v328
          %v330 = vsel %vm329, 1, 0
          %v331 = vcvt.s32.f32 %v330
          %v332 = vld [vmem:[#allocation3] sm:$0xff]
          %v333 = vld [vmem:[#allocation3 + $0x8] sm:$0xff]
          %v334 = vld [vmem:[#allocation3 + $0x10] sm:$0xff]
          %v335 = vld [vmem:[#allocation3 + $0x18] sm:$0xff]
          %v336 = vld [vmem:[#allocation3 + $0x20] sm:$0xff]
          %v337 = vld [vmem:[#allocation3 + $0x28] sm:$0xff]
          %v338 = vld [vmem:[#allocation3 + $0x30] sm:$0x3]
          %vm339 = vcmask 408576
          %v341 = vsel %vm339, %v331, 0
          %vm343 = vcmask 1041408
          %v345 = vsel %vm343, %v338, 0
          %347 = vmatprep.subr.mxu0 0.0
          %348 = vmatpush1.msra.mxu0 0.0
          %349 = vmatprep.subr.mxu0 0.0
          %350 = vmatpush1.msra.mxu0 0.0
          %351 = vmatprep.subr.mxu0 0.0
          %352 = vmatpush1.msra.mxu0 0.0
          %353 = vmatprep.subr.mxu0 0.0
          %354 = vmatpush1.msra.mxu0 0.0
          %355 = vmatprep.subr.mxu0 0.0
          %356 = vmatpush1.msra.mxu0 0.0
          %357 = vmatprep.subr.mxu0 0.0
          %358 = vmatpush1.msra.mxu0 0.0
          %359 = vmatprep.subr.mxu0 0.0
          %360 = vmatpush1.msra.mxu0 0.0
          %361 = vmatprep.subr.mxu0 0.0
          %362 = vmatpush1.msra.mxu0 0.0
          %363 = vmatprep.subr.mxu0 0.0
          %364 = vmatpush1.msra.mxu0 0.0
          %365 = vmatprep.subr.mxu0 0.0
          %366 = vmatpush1.msra.mxu0 %v345
          %367 = vmatprep.subr.mxu0 0.0
          %368 = vmatpush1.msra.mxu0 %v337
          %369 = vmatprep.subr.mxu0 0.0
          %370 = vmatpush1.msra.mxu0 %v336
          %371 = vmatprep.subr.mxu0 0.0
          %372 = vmatpush1.msra.mxu0 %v335
          %373 = vmatprep.subr.mxu0 0.0
          %374 = vmatpush1.msra.mxu0 %v334
          %375 = vmatprep.subr.mxu0 0.0
          %376 = vmatpush1.msra.mxu0 %v333
          %377 = vmatprep.subr.mxu0 0.0
          %378 = vmatpush1.msra.mxu0 %v332
          %379 = vmatprep.subr.mxu0 0.0
          %380 = vmatpush2.msra.mxu0 0.0
          %381 = vmatprep.subr.mxu0 0.0
          %382 = vmatpush2.msra.mxu0 0.0
          %383 = vmatprep.subr.mxu0 0.0
          %384 = vmatpush2.msra.mxu0 0.0
          %385 = vmatprep.subr.mxu0 0.0
          %386 = vmatpush2.msra.mxu0 0.0
          %387 = vmatprep.subr.mxu0 0.0
          %388 = vmatpush2.msra.mxu0 0.0
          %389 = vmatprep.subr.mxu0 0.0
          %390 = vmatpush2.msra.mxu0 0.0
          %391 = vmatprep.subr.mxu0 0.0
          %392 = vmatpush2.msra.mxu0 0.0
          %393 = vmatprep.subr.mxu0 0.0
          %394 = vmatpush2.msra.mxu0 0.0
          %395 = vmatprep.subr.mxu0 0.0
          %396 = vmatpush2.msra.mxu0 0.0
          %397 = vmatprep.subr.mxu0 0.0
          %398 = vmatpush2.msra.mxu0 0.0
          %399 = vmatprep.subr.mxu0 0.0
          %400 = vmatpush2.msra.mxu0 0.0
          %401 = vmatprep.subr.mxu0 0.0
          %402 = vmatpush2.msra.mxu0 0.0
          %403 = vmatprep.subr.mxu0 0.0
          %404 = vmatpush2.msra.mxu0 0.0
          %405 = vmatprep.subr.mxu0 0.0
          %406 = vmatpush2.msra.mxu0 0.0
          %407 = vmatprep.subr.mxu0 0.0
          %408 = vmatpush2.msra.mxu0 0.0
          %409 = vmatprep.subr.mxu0 0.0
          %410 = vmatpush2.msra.mxu0 0.0
          %411 = vmatprep.mubr.f32.mxu0 0.0
          %412 = vmatmul.mubr.f32.gmra.mxu0 %v341
          %v413 = vpop.f32.mrf.mxu0
          %v414 = vadd.f32 0.0, %v413
          %v415 = vpop.f32.mrf.mxu0
          %416 = vdwg.mxu0
          %v417 = vpack.c.bf16 %v414, %v414
          %v418 = vld [vmem:[#allocation6] sm:$0xff]
          %v419 = vld [vmem:[#allocation6 + $0x8] sm:$0xff]
          %v420 = vld [vmem:[#allocation6 + $0x10] sm:$0xff]
          %v421 = vld [vmem:[#allocation6 + $0x18] sm:$0xff]
          %v422 = vld [vmem:[#allocation6 + $0x20] sm:$0xff]
          %v423 = vld [vmem:[#allocation6 + $0x28] sm:$0xff]
          %v424 = vld [vmem:[#allocation6 + $0x30] sm:$0xff]
          %v425 = vld [vmem:[#allocation6 + $0x38] sm:$0xff]
          %v426 = vld [vmem:[#allocation6 + $0x40] sm:$0xff]
          %v427 = vld [vmem:[#allocation6 + $0x48] sm:$0xff]
          %v428 = vld [vmem:[#allocation6 + $0x50] sm:$0xff]
          %v429 = vld [vmem:[#allocation6 + $0x58] sm:$0xff]
          %v430 = vld [vmem:[#allocation6 + $0x60] sm:$0xff]
          %v431 = vld [vmem:[#allocation6 + $0x68] sm:$0xff]
          %v432 = vld [vmem:[#allocation6 + $0x70] sm:$0xff]
          %v433 = vld [vmem:[#allocation6 + $0x78] sm:$0xff]
          %v434 = vld [vmem:[#allocation6 + $0x80] sm:$0xff]
          %v435 = vld [vmem:[#allocation6 + $0x88] sm:$0xff]
          %v436 = vld [vmem:[#allocation6 + $0x90] sm:$0xff]
          %v437 = vld [vmem:[#allocation6 + $0x98] sm:$0xff]
          %v438 = vld [vmem:[#allocation6 + $0xa0] sm:$0xff]
          %v439 = vld [vmem:[#allocation6 + $0xa8] sm:$0xff]
          %v440 = vld [vmem:[#allocation6 + $0xb0] sm:$0xff]
          %v441 = vld [vmem:[#allocation6 + $0xb8] sm:$0xff]
          %v442 = vld [vmem:[#allocation6 + $0xc0] sm:$0xff]
          %v443 = vld [vmem:[#allocation6 + $0xc8] sm:$0xff]
          %v444 = vld [vmem:[#allocation6 + $0xd0] sm:$0xff]
          %v445 = vld [vmem:[#allocation6 + $0xd8] sm:$0xff]
          %v446 = vld [vmem:[#allocation6 + $0xe0] sm:$0xff]
          %v447 = vld [vmem:[#allocation6 + $0xe8] sm:$0xff]
          %v448 = vld [vmem:[#allocation6 + $0xf0] sm:$0xff]
          %v449 = vld [vmem:[#allocation6 + $0xf8] sm:$0xff]
          %v450 = vld [vmem:[%s3] sm:$0xf]
          %v452 = vlaneseq
          %v453 = vshrl.u32 %v452, 7
          %v454 = vsub.s32 0, %v453
          %v455 = vrot.slane %v450, %v454
          %v456 = vlaneseq
          %v457 = vshrl.u32 %v456, 7
          %v458 = vsub.s32 1, %v457
          %v459 = vrot.slane %v450, %v458
          %v460 = vlaneseq
          %v461 = vshrl.u32 %v460, 7
          %v462 = vsub.s32 2, %v461
          %v463 = vrot.slane %v450, %v462
          %v464 = vlaneseq
          %v465 = vshrl.u32 %v464, 7
          %v466 = vsub.s32 3, %v465
          %v467 = vrot.slane %v450, %v466
          %v504 = vunpack.c.l.b16 %v418
          %v505 = vunpack.c.h.b16 %v418
          %v506 = vunpack.c.l.b16 %v419
          %v507 = vunpack.c.h.b16 %v419
          %v508 = vunpack.c.l.b16 %v420
          %v509 = vunpack.c.h.b16 %v420
          %v510 = vunpack.c.l.b16 %v421
          %v511 = vunpack.c.h.b16 %v421
          %v512 = vunpack.c.l.b16 %v422
          %v513 = vunpack.c.h.b16 %v422
          %v514 = vunpack.c.l.b16 %v423
          %v515 = vunpack.c.h.b16 %v423
          %v516 = vunpack.c.l.b16 %v424
          %v517 = vunpack.c.h.b16 %v424
          %v518 = vunpack.c.l.b16 %v425
          %v519 = vunpack.c.h.b16 %v425
          %v520 = vunpack.c.l.b16 %v426
          %v521 = vunpack.c.h.b16 %v426
          %v522 = vunpack.c.l.b16 %v427
          %v523 = vunpack.c.h.b16 %v427
          %v524 = vunpack.c.l.b16 %v428
          %v525 = vunpack.c.h.b16 %v428
          %v526 = vunpack.c.l.b16 %v429
          %v527 = vunpack.c.h.b16 %v429
          %v528 = vunpack.c.l.b16 %v430
          %v529 = vunpack.c.h.b16 %v430
          %v530 = vunpack.c.l.b16 %v431
          %v531 = vunpack.c.h.b16 %v431
          %v532 = vunpack.c.l.b16 %v432
          %v533 = vunpack.c.h.b16 %v432
          %v534 = vunpack.c.l.b16 %v433
          %v535 = vunpack.c.h.b16 %v433
          %v536 = vunpack.c.l.b16 %v434
          %v537 = vunpack.c.h.b16 %v434
          %v538 = vunpack.c.l.b16 %v435
          %v539 = vunpack.c.h.b16 %v435
          %v540 = vunpack.c.l.b16 %v436
          %v541 = vunpack.c.h.b16 %v436
          %v542 = vunpack.c.l.b16 %v437
          %v543 = vunpack.c.h.b16 %v437
          %v544 = vunpack.c.l.b16 %v438
          %v545 = vunpack.c.h.b16 %v438
          %v546 = vunpack.c.l.b16 %v439
          %v547 = vunpack.c.h.b16 %v439
          %v548 = vunpack.c.l.b16 %v440
          %v549 = vunpack.c.h.b16 %v440
          %v550 = vunpack.c.l.b16 %v441
          %v551 = vunpack.c.h.b16 %v441
          %v552 = vunpack.c.l.b16 %v442
          %v553 = vunpack.c.h.b16 %v442
          %v554 = vunpack.c.l.b16 %v443
          %v555 = vunpack.c.h.b16 %v443
          %v556 = vunpack.c.l.b16 %v444
          %v557 = vunpack.c.h.b16 %v444
          %v558 = vunpack.c.l.b16 %v445
          %v559 = vunpack.c.h.b16 %v445
          %v560 = vunpack.c.l.b16 %v446
          %v561 = vunpack.c.h.b16 %v446
          %v562 = vunpack.c.l.b16 %v447
          %v563 = vunpack.c.h.b16 %v447
          %v564 = vunpack.c.l.b16 %v448
          %v565 = vunpack.c.h.b16 %v448
          %v566 = vunpack.c.l.b16 %v449
          %v567 = vunpack.c.h.b16 %v449
          %v568 = vpack.c.b16 %v508, %v504
          %v569 = vpack.c.b16 %v509, %v505
          %v570 = vpack.c.b16 %v510, %v506
          %v571 = vpack.c.b16 %v511, %v507
          %v572 = vpack.c.b16 %v516, %v512
          %v573 = vpack.c.b16 %v517, %v513
          %v574 = vpack.c.b16 %v518, %v514
          %v575 = vpack.c.b16 %v519, %v515
          %v576 = vpack.c.b16 %v524, %v520
          %v577 = vpack.c.b16 %v525, %v521
          %v578 = vpack.c.b16 %v526, %v522
          %v579 = vpack.c.b16 %v527, %v523
          %v580 = vpack.c.b16 %v532, %v528
          %v581 = vpack.c.b16 %v533, %v529
          %v582 = vpack.c.b16 %v534, %v530
          %v583 = vpack.c.b16 %v535, %v531
          %v584 = vpack.c.b16 %v540, %v536
          %v585 = vpack.c.b16 %v541, %v537
          %v586 = vpack.c.b16 %v542, %v538
          %v587 = vpack.c.b16 %v543, %v539
          %v588 = vpack.c.b16 %v548, %v544
          %v589 = vpack.c.b16 %v549, %v545
          %v590 = vpack.c.b16 %v550, %v546
          %v591 = vpack.c.b16 %v551, %v547
          %v592 = vpack.c.b16 %v556, %v552
          %v593 = vpack.c.b16 %v557, %v553
          %v594 = vpack.c.b16 %v558, %v554
          %v595 = vpack.c.b16 %v559, %v555
          %v596 = vpack.c.b16 %v564, %v560
          %v597 = vpack.c.b16 %v565, %v561
          %v598 = vpack.c.b16 %v566, %v562
          %v599 = vpack.c.b16 %v567, %v563
          %632 = vmatprep.subr.bf16.mxu0 %v597
          %633 = vmatpush1.bf16.msra.mxu0 %v596
          %634 = vmatprep.subr.bf16.mxu0 %v593
          %635 = vmatpush1.bf16.msra.mxu0 %v592
          %636 = vmatprep.subr.bf16.mxu0 %v589
          %637 = vmatpush1.bf16.msra.mxu0 %v588
          %638 = vmatprep.subr.bf16.mxu0 %v585
          %639 = vmatpush1.bf16.msra.mxu0 %v584
          %640 = vmatprep.subr.bf16.mxu0 %v581
          %641 = vmatpush1.bf16.msra.mxu0 %v580
          %642 = vmatprep.subr.bf16.mxu0 %v577
          %643 = vmatpush1.bf16.msra.mxu0 %v576
          %644 = vmatprep.subr.bf16.mxu0 %v573
          %645 = vmatpush1.bf16.msra.mxu0 %v572
          %646 = vmatprep.subr.bf16.mxu0 %v569
          %647 = vmatpush1.bf16.msra.mxu0 %v568
          %648 = vmatprep.subr.bf16.mxu0 0
          %649 = vmatpush2.bf16.msra.mxu0 0
          %650 = vmatprep.subr.bf16.mxu0 0
          %651 = vmatpush2.bf16.msra.mxu0 0
          %652 = vmatprep.subr.bf16.mxu0 0
          %653 = vmatpush2.bf16.msra.mxu0 0
          %654 = vmatprep.subr.bf16.mxu0 0
          %655 = vmatpush2.bf16.msra.mxu0 0
          %656 = vmatprep.subr.bf16.mxu0 0
          %657 = vmatpush2.bf16.msra.mxu0 0
          %658 = vmatprep.subr.bf16.mxu0 0
          %659 = vmatpush2.bf16.msra.mxu0 0
          %660 = vmatprep.subr.bf16.mxu0 0
          %661 = vmatpush2.bf16.msra.mxu0 0
          %662 = vmatprep.subr.bf16.mxu0 0
          %663 = vmatpush2.bf16.msra.mxu0 0
          %664 = vmatprep.mubr.bf16.mxu0 0
          %665 = vmatmul.mubr.bf16.gmra.mxu0 %v417
          %v666 = vpop.f32.mrf.mxu0
          %v667 = vadd.f32 %v455, %v666
          %v668 = vpop.f32.mrf.mxu0
          %v669 = vadd.f32 %v459, %v668
          %v670 = vpop.f32.mrf.mxu0
          %v671 = vpop.f32.mrf.mxu0
          %672 = vdwg.mxu0
          %673 = vmatprep.subr.bf16.mxu0 %v599
          %674 = vmatpush1.bf16.msra.mxu0 %v598
          %675 = vmatprep.subr.bf16.mxu0 %v595
          %676 = vmatpush1.bf16.msra.mxu0 %v594
          %677 = vmatprep.subr.bf16.mxu0 %v591
          %678 = vmatpush1.bf16.msra.mxu0 %v590
          %679 = vmatprep.subr.bf16.mxu0 %v587
          %680 = vmatpush1.bf16.msra.mxu0 %v586
          %681 = vmatprep.subr.bf16.mxu0 %v583
          %682 = vmatpush1.bf16.msra.mxu0 %v582
          %683 = vmatprep.subr.bf16.mxu0 %v579
          %684 = vmatpush1.bf16.msra.mxu0 %v578
          %685 = vmatprep.subr.bf16.mxu0 %v575
          %686 = vmatpush1.bf16.msra.mxu0 %v574
          %687 = vmatprep.subr.bf16.mxu0 %v571
          %688 = vmatpush1.bf16.msra.mxu0 %v570
          %689 = vmatprep.subr.bf16.mxu0 0
          %690 = vmatpush2.bf16.msra.mxu0 0
          %691 = vmatprep.subr.bf16.mxu0 0
          %692 = vmatpush2.bf16.msra.mxu0 0
          %693 = vmatprep.subr.bf16.mxu0 0
          %694 = vmatpush2.bf16.msra.mxu0 0
          %695 = vmatprep.subr.bf16.mxu0 0
          %696 = vmatpush2.bf16.msra.mxu0 0
          %697 = vmatprep.subr.bf16.mxu0 0
          %698 = vmatpush2.bf16.msra.mxu0 0
          %699 = vmatprep.subr.bf16.mxu0 0
          %700 = vmatpush2.bf16.msra.mxu0 0
          %701 = vmatprep.subr.bf16.mxu0 0
          %702 = vmatpush2.bf16.msra.mxu0 0
          %703 = vmatprep.subr.bf16.mxu0 0
          %704 = vmatpush2.bf16.msra.mxu0 0
          %705 = vmatprep.mubr.bf16.mxu0 0
          %706 = vmatmul.mubr.bf16.gmra.mxu0 %v417
          %v707 = vpop.f32.mrf.mxu0
          %v708 = vadd.f32 %v463, %v707
          %v709 = vpop.f32.mrf.mxu0
          %v710 = vadd.f32 %v467, %v709
          %v711 = vpop.f32.mrf.mxu0
          %v712 = vpop.f32.mrf.mxu0
          %713 = vdwg.mxu0
          %v714 = vxor.u32 %v667, 2147483648
          %v715 = vxor.u32 %v669, 2147483648
          %v716 = vxor.u32 %v708, 2147483648
          %v717 = vxor.u32 %v710, 2147483648
          %v718 = vmul.f32 %v714, 1.442695
          %v719 = vpow.pop %v718
          %v720 = vmul.f32 %v715, 1.442695
          %v721 = vpow.pop %v720
          %v722 = vmul.f32 %v716, 1.442695
          %v723 = vpow.pop %v722
          %v724 = vmul.f32 %v717, 1.442695
          %v725 = vpow.pop %v724
          %v726 = vadd.f32 %v719, 1.0
          %v727 = vadd.f32 %v721, 1.0
          %v728 = vadd.f32 %v723, 1.0
          %v729 = vadd.f32 %v725, 1.0
          %v730 = vrcp.pop %v726
          %v731 = vmul.f32 1.0, %v730
          %v732 = vrcp.pop %v727
          %v733 = vmul.f32 1.0, %v732
          %v734 = vrcp.pop %v728
          %v735 = vmul.f32 1.0, %v734
          %v736 = vrcp.pop %v729
          %v737 = vmul.f32 1.0, %v736
          %v738 = vmul.f32 %v667, %v731
          %v739 = vmul.f32 %v669, %v733
          %v740 = vmul.f32 %v708, %v735
          %v741 = vmul.f32 %v710, %v737
          %v742 = vpack.c.bf16 %v738, %v738
          %v743 = vpack.c.bf16 %v739, %v739
          %v744 = vpack.c.bf16 %v740, %v740
          %v745 = vpack.c.bf16 %v741, %v741
          %v750 = vunpack.c.l.b16 %v742
          %v751 = vunpack.c.l.b16 %v743
          %v752 = vunpack.c.l.b16 %v744
          %v753 = vunpack.c.l.b16 %v745
          %v754 = vpack.c.b16 %v751, %v750
          %v755 = vpack.c.b16 %v753, %v752
          %758 = vst [vmem:[#allocation2] sm:$0xff] %v754
          %759 = vst [vmem:[#allocation2 + $0x8] sm:$0xff] %v755
        $region60: #{tpu_custom_call.1} parent=43 // pred_fallthru
          _
        %v760 = vld [vmem:[#allocation2] sm:$0xff]
        %v761 = vld [vmem:[#allocation2 + $0x8] sm:$0xff]
        %v762 = vld [vmem:[%s278] sm:$0xff]
        %v763 = vld [vmem:[%s278 + $0x8] sm:$0xff]
        %v764 = vld [vmem:[%s278 + $0x10] sm:$0xff]
        %v765 = vld [vmem:[%s278 + $0x18] sm:$0xff]
        %v766 = vld [vmem:[%s278 + $0x20] sm:$0xff]
        %v767 = vld [vmem:[%s278 + $0x28] sm:$0xff]
        %v768 = vld [vmem:[%s278 + $0x30] sm:$0xff]
        %v769 = vld [vmem:[%s278 + $0x38] sm:$0xff]
        %v770 = vld [vmem:[%s278 + $0x40] sm:$0xff]
        %v771 = vld [vmem:[%s278 + $0x48] sm:$0xff]
        %v772 = vld [vmem:[%s278 + $0x50] sm:$0xff]
        %v773 = vld [vmem:[%s278 + $0x58] sm:$0xff]
        %v774 = vld [vmem:[%s278 + $0x60] sm:$0xff]
        %v775 = vld [vmem:[%s278 + $0x68] sm:$0xff]
        %v776 = vld [vmem:[%s278 + $0x70] sm:$0xff]
        %v777 = vld [vmem:[%s278 + $0x78] sm:$0xff]
        %v778 = vld [vmem:[%s278 + $0x80] sm:$0xff]
        %v779 = vld [vmem:[%s278 + $0x88] sm:$0xff]
        %v780 = vld [vmem:[%s278 + $0x90] sm:$0xff]
        %v781 = vld [vmem:[%s278 + $0x98] sm:$0xff]
        %v782 = vld [vmem:[%s278 + $0xa0] sm:$0xff]
        %v783 = vld [vmem:[%s278 + $0xa8] sm:$0xff]
        %v784 = vld [vmem:[%s278 + $0xb0] sm:$0xff]
        %v785 = vld [vmem:[%s278 + $0xb8] sm:$0xff]
        %v786 = vld [vmem:[%s278 + $0xc0] sm:$0xff]
        %v787 = vld [vmem:[%s278 + $0xc8] sm:$0xff]
        %v788 = vld [vmem:[%s278 + $0xd0] sm:$0xff]
        %v789 = vld [vmem:[%s278 + $0xd8] sm:$0xff]
        %v790 = vld [vmem:[%s278 + $0xe0] sm:$0xff]
        %v791 = vld [vmem:[%s278 + $0xe8] sm:$0xff]
        %v792 = vld [vmem:[%s278 + $0xf0] sm:$0xff]
        %v793 = vld [vmem:[%s278 + $0xf8] sm:$0xff]
        %v794 = vld [vmem:[%s278 + $0x100] sm:$0xff]
        %v795 = vld [vmem:[%s278 + $0x108] sm:$0xff]
        %v796 = vld [vmem:[%s278 + $0x110] sm:$0xff]
        %v797 = vld [vmem:[%s278 + $0x118] sm:$0xff]
        %v798 = vld [vmem:[%s278 + $0x120] sm:$0xff]
        %v799 = vld [vmem:[%s278 + $0x128] sm:$0xff]
        %v800 = vld [vmem:[%s278 + $0x130] sm:$0xff]
        %v801 = vld [vmem:[%s278 + $0x138] sm:$0xff]
        %v802 = vld [vmem:[%s278 + $0x140] sm:$0xff]
        %v803 = vld [vmem:[%s278 + $0x148] sm:$0xff]
        %v804 = vld [vmem:[%s278 + $0x150] sm:$0xff]
        %v805 = vld [vmem:[%s278 + $0x158] sm:$0xff]
        %v806 = vld [vmem:[%s278 + $0x160] sm:$0xff]
        %v807 = vld [vmem:[%s278 + $0x168] sm:$0xff]
        %v808 = vld [vmem:[%s278 + $0x170] sm:$0xff]
        %v809 = vld [vmem:[%s278 + $0x178] sm:$0xff]
        %v810 = vld [vmem:[%s278 + $0x180] sm:$0xff]
        %v811 = vld [vmem:[%s278 + $0x188] sm:$0xff]
        %v812 = vld [vmem:[%s278 + $0x190] sm:$0xff]
        %v813 = vld [vmem:[%s278 + $0x198] sm:$0xff]
        %v814 = vld [vmem:[%s278 + $0x1a0] sm:$0xff]
        %v815 = vld [vmem:[%s278 + $0x1a8] sm:$0xff]
        %v816 = vld [vmem:[%s278 + $0x1b0] sm:$0xff]
        %v817 = vld [vmem:[%s278 + $0x1b8] sm:$0xff]
        %v818 = vld [vmem:[%s278 + $0x1c0] sm:$0xff]
        %v819 = vld [vmem:[%s278 + $0x1c8] sm:$0xff]
        %v820 = vld [vmem:[%s278 + $0x1d0] sm:$0xff]
        %v821 = vld [vmem:[%s278 + $0x1d8] sm:$0xff]
        %v822 = vld [vmem:[%s278 + $0x1e0] sm:$0xff]
        %v823 = vld [vmem:[%s278 + $0x1e8] sm:$0xff]
        %v824 = vld [vmem:[%s278 + $0x1f0] sm:$0xff]
        %v825 = vld [vmem:[%s278 + $0x1f8] sm:$0xff]
        %v826 = vld [vmem:[%s315] sm:$0x3]
        %v828 = vlaneseq
        %v829 = vshrl.u32 %v828, 7
        %v830 = vsub.s32 0, %v829
        %v831 = vrot.slane %v826, %v830
        %v832 = vlaneseq
        %v833 = vshrl.u32 %v832, 7
        %v834 = vsub.s32 1, %v833
        %v835 = vrot.slane %v826, %v834
        %v840 = vunpack.c.l.b16 %v760
        %v841 = vunpack.c.h.b16 %v760
        %v842 = vunpack.c.l.b16 %v761
        %v843 = vunpack.c.h.b16 %v761
        %v844 = vpack.c.b16 %v840, %v840
        %v845 = vpack.c.b16 %v841, %v841
        %v846 = vpack.c.b16 %v842, %v842
        %v847 = vpack.c.b16 %v843, %v843
        %v916 = vunpack.c.l.b16 %v762
        %v917 = vunpack.c.h.b16 %v762
        %v918 = vunpack.c.l.b16 %v763
        %v919 = vunpack.c.h.b16 %v763
        %v920 = vunpack.c.l.b16 %v764
        %v921 = vunpack.c.h.b16 %v764
        %v922 = vunpack.c.l.b16 %v765
        %v923 = vunpack.c.h.b16 %v765
        %v924 = vunpack.c.l.b16 %v766
        %v925 = vunpack.c.h.b16 %v766
        %v926 = vunpack.c.l.b16 %v767
        %v927 = vunpack.c.h.b16 %v767
        %v928 = vunpack.c.l.b16 %v768
        %v929 = vunpack.c.h.b16 %v768
        %v930 = vunpack.c.l.b16 %v769
        %v931 = vunpack.c.h.b16 %v769
        %v932 = vunpack.c.l.b16 %v770
        %v933 = vunpack.c.h.b16 %v770
        %v934 = vunpack.c.l.b16 %v771
        %v935 = vunpack.c.h.b16 %v771
        %v936 = vunpack.c.l.b16 %v772
        %v937 = vunpack.c.h.b16 %v772
        %v938 = vunpack.c.l.b16 %v773
        %v939 = vunpack.c.h.b16 %v773
        %v940 = vunpack.c.l.b16 %v774
        %v941 = vunpack.c.h.b16 %v774
        %v942 = vunpack.c.l.b16 %v775
        %v943 = vunpack.c.h.b16 %v775
        %v944 = vunpack.c.l.b16 %v776
        %v945 = vunpack.c.h.b16 %v776
        %v946 = vunpack.c.l.b16 %v777
        %v947 = vunpack.c.h.b16 %v777
        %v948 = vunpack.c.l.b16 %v778
        %v949 = vunpack.c.h.b16 %v778
        %v950 = vunpack.c.l.b16 %v779
        %v951 = vunpack.c.h.b16 %v779
        %v952 = vunpack.c.l.b16 %v780
        %v953 = vunpack.c.h.b16 %v780
        %v954 = vunpack.c.l.b16 %v781
        %v955 = vunpack.c.h.b16 %v781
        %v956 = vunpack.c.l.b16 %v782
        %v957 = vunpack.c.h.b16 %v782
        %v958 = vunpack.c.l.b16 %v783
        %v959 = vunpack.c.h.b16 %v783
        %v960 = vunpack.c.l.b16 %v784
        %v961 = vunpack.c.h.b16 %v784
        %v962 = vunpack.c.l.b16 %v785
        %v963 = vunpack.c.h.b16 %v785
        %v964 = vunpack.c.l.b16 %v786
        %v965 = vunpack.c.h.b16 %v786
        %v966 = vunpack.c.l.b16 %v787
        %v967 = vunpack.c.h.b16 %v787
        %v968 = vunpack.c.l.b16 %v788
        %v969 = vunpack.c.h.b16 %v788
        %v970 = vunpack.c.l.b16 %v789
        %v971 = vunpack.c.h.b16 %v789
        %v972 = vunpack.c.l.b16 %v790
        %v973 = vunpack.c.h.b16 %v790
        %v974 = vunpack.c.l.b16 %v791
        %v975 = vunpack.c.h.b16 %v791
        %v976 = vunpack.c.l.b16 %v792
        %v977 = vunpack.c.h.b16 %v792
        %v978 = vunpack.c.l.b16 %v793
        %v979 = vunpack.c.h.b16 %v793
        %v980 = vunpack.c.l.b16 %v794
        %v981 = vunpack.c.h.b16 %v794
        %v982 = vunpack.c.l.b16 %v795
        %v983 = vunpack.c.h.b16 %v795
        %v984 = vunpack.c.l.b16 %v796
        %v985 = vunpack.c.h.b16 %v796
        %v986 = vunpack.c.l.b16 %v797
        %v987 = vunpack.c.h.b16 %v797
        %v988 = vunpack.c.l.b16 %v798
        %v989 = vunpack.c.h.b16 %v798
        %v990 = vunpack.c.l.b16 %v799
        %v991 = vunpack.c.h.b16 %v799
        %v992 = vunpack.c.l.b16 %v800
        %v993 = vunpack.c.h.b16 %v800
        %v994 = vunpack.c.l.b16 %v801
        %v995 = vunpack.c.h.b16 %v801
        %v996 = vunpack.c.l.b16 %v802
        %v997 = vunpack.c.h.b16 %v802
        %v998 = vunpack.c.l.b16 %v803
        %v999 = vunpack.c.h.b16 %v803
        %v1000 = vunpack.c.l.b16 %v804
        %v1001 = vunpack.c.h.b16 %v804
        %v1002 = vunpack.c.l.b16 %v805
        %v1003 = vunpack.c.h.b16 %v805
        %v1004 = vunpack.c.l.b16 %v806
        %v1005 = vunpack.c.h.b16 %v806
        %v1006 = vunpack.c.l.b16 %v807
        %v1007 = vunpack.c.h.b16 %v807
        %v1008 = vunpack.c.l.b16 %v808
        %v1009 = vunpack.c.h.b16 %v808
        %v1010 = vunpack.c.l.b16 %v809
        %v1011 = vunpack.c.h.b16 %v809
        %v1012 = vunpack.c.l.b16 %v810
        %v1013 = vunpack.c.h.b16 %v810
        %v1014 = vunpack.c.l.b16 %v811
        %v1015 = vunpack.c.h.b16 %v811
        %v1016 = vunpack.c.l.b16 %v812
        %v1017 = vunpack.c.h.b16 %v812
        %v1018 = vunpack.c.l.b16 %v813
        %v1019 = vunpack.c.h.b16 %v813
        %v1020 = vunpack.c.l.b16 %v814
        %v1021 = vunpack.c.h.b16 %v814
        %v1022 = vunpack.c.l.b16 %v815
        %v1023 = vunpack.c.h.b16 %v815
        %v1024 = vunpack.c.l.b16 %v816
        %v1025 = vunpack.c.h.b16 %v816
        %v1026 = vunpack.c.l.b16 %v817
        %v1027 = vunpack.c.h.b16 %v817
        %v1028 = vunpack.c.l.b16 %v818
        %v1029 = vunpack.c.h.b16 %v818
        %v1030 = vunpack.c.l.b16 %v819
        %v1031 = vunpack.c.h.b16 %v819
        %v1032 = vunpack.c.l.b16 %v820
        %v1033 = vunpack.c.h.b16 %v820
        %v1034 = vunpack.c.l.b16 %v821
        %v1035 = vunpack.c.h.b16 %v821
        %v1036 = vunpack.c.l.b16 %v822
        %v1037 = vunpack.c.h.b16 %v822
        %v1038 = vunpack.c.l.b16 %v823
        %v1039 = vunpack.c.h.b16 %v823
        %v1040 = vunpack.c.l.b16 %v824
        %v1041 = vunpack.c.h.b16 %v824
        %v1042 = vunpack.c.l.b16 %v825
        %v1043 = vunpack.c.h.b16 %v825
        %v1044 = vpack.c.b16 %v918, %v916
        %v1045 = vpack.c.b16 %v919, %v917
        %v1046 = vpack.c.b16 %v922, %v920
        %v1047 = vpack.c.b16 %v923, %v921
        %v1048 = vpack.c.b16 %v926, %v924
        %v1049 = vpack.c.b16 %v927, %v925
        %v1050 = vpack.c.b16 %v930, %v928
        %v1051 = vpack.c.b16 %v931, %v929
        %v1052 = vpack.c.b16 %v934, %v932
        %v1053 = vpack.c.b16 %v935, %v933
        %v1054 = vpack.c.b16 %v938, %v936
        %v1055 = vpack.c.b16 %v939, %v937
        %v1056 = vpack.c.b16 %v942, %v940
        %v1057 = vpack.c.b16 %v943, %v941
        %v1058 = vpack.c.b16 %v946, %v944
        %v1059 = vpack.c.b16 %v947, %v945
        %v1060 = vpack.c.b16 %v950, %v948
        %v1061 = vpack.c.b16 %v951, %v949
        %v1062 = vpack.c.b16 %v954, %v952
        %v1063 = vpack.c.b16 %v955, %v953
        %v1064 = vpack.c.b16 %v958, %v956
        %v1065 = vpack.c.b16 %v959, %v957
        %v1066 = vpack.c.b16 %v962, %v960
        %v1067 = vpack.c.b16 %v963, %v961
        %v1068 = vpack.c.b16 %v966, %v964
        %v1069 = vpack.c.b16 %v967, %v965
        %v1070 = vpack.c.b16 %v970, %v968
        %v1071 = vpack.c.b16 %v971, %v969
        %v1072 = vpack.c.b16 %v974, %v972
        %v1073 = vpack.c.b16 %v975, %v973
        %v1074 = vpack.c.b16 %v978, %v976
        %v1075 = vpack.c.b16 %v979, %v977
        %v1076 = vpack.c.b16 %v982, %v980
        %v1077 = vpack.c.b16 %v983, %v981
        %v1078 = vpack.c.b16 %v986, %v984
        %v1079 = vpack.c.b16 %v987, %v985
        %v1080 = vpack.c.b16 %v990, %v988
        %v1081 = vpack.c.b16 %v991, %v989
        %v1082 = vpack.c.b16 %v994, %v992
        %v1083 = vpack.c.b16 %v995, %v993
        %v1084 = vpack.c.b16 %v998, %v996
        %v1085 = vpack.c.b16 %v999, %v997
        %v1086 = vpack.c.b16 %v1002, %v1000
        %v1087 = vpack.c.b16 %v1003, %v1001
        %v1088 = vpack.c.b16 %v1006, %v1004
        %v1089 = vpack.c.b16 %v1007, %v1005
        %v1090 = vpack.c.b16 %v1010, %v1008
        %v1091 = vpack.c.b16 %v1011, %v1009
        %v1092 = vpack.c.b16 %v1014, %v1012
        %v1093 = vpack.c.b16 %v1015, %v1013
        %v1094 = vpack.c.b16 %v1018, %v1016
        %v1095 = vpack.c.b16 %v1019, %v1017
        %v1096 = vpack.c.b16 %v1022, %v1020
        %v1097 = vpack.c.b16 %v1023, %v1021
        %v1098 = vpack.c.b16 %v1026, %v1024
        %v1099 = vpack.c.b16 %v1027, %v1025
        %v1100 = vpack.c.b16 %v1030, %v1028
        %v1101 = vpack.c.b16 %v1031, %v1029
        %v1102 = vpack.c.b16 %v1034, %v1032
        %v1103 = vpack.c.b16 %v1035, %v1033
        %v1104 = vpack.c.b16 %v1038, %v1036
        %v1105 = vpack.c.b16 %v1039, %v1037
        %v1106 = vpack.c.b16 %v1042, %v1040
        %v1107 = vpack.c.b16 %v1043, %v1041
        %1172 = vmatprep.subr.bf16.mxu0 %v1059
        %1173 = vmatpush1.bf16.msra.mxu0 %v1058
        %1174 = vmatprep.subr.bf16.mxu0 %v1057
        %1175 = vmatpush1.bf16.msra.mxu0 %v1056
        %1176 = vmatprep.subr.bf16.mxu0 %v1055
        %1177 = vmatpush1.bf16.msra.mxu0 %v1054
        %1178 = vmatprep.subr.bf16.mxu0 %v1053
        %1179 = vmatpush1.bf16.msra.mxu0 %v1052
        %1180 = vmatprep.subr.bf16.mxu0 %v1051
        %1181 = vmatpush1.bf16.msra.mxu0 %v1050
        %1182 = vmatprep.subr.bf16.mxu0 %v1049
        %1183 = vmatpush1.bf16.msra.mxu0 %v1048
        %1184 = vmatprep.subr.bf16.mxu0 %v1047
        %1185 = vmatpush1.bf16.msra.mxu0 %v1046
        %1186 = vmatprep.subr.bf16.mxu0 %v1045
        %1187 = vmatpush1.bf16.msra.mxu0 %v1044
        %1188 = vmatprep.subr.bf16.mxu0 %v1075
        %1189 = vmatpush2.bf16.msra.mxu0 %v1074
        %1190 = vmatprep.subr.bf16.mxu0 %v1073
        %1191 = vmatpush2.bf16.msra.mxu0 %v1072
        %1192 = vmatprep.subr.bf16.mxu0 %v1071
        %1193 = vmatpush2.bf16.msra.mxu0 %v1070
        %1194 = vmatprep.subr.bf16.mxu0 %v1069
        %1195 = vmatpush2.bf16.msra.mxu0 %v1068
        %1196 = vmatprep.subr.bf16.mxu0 %v1067
        %1197 = vmatpush2.bf16.msra.mxu0 %v1066
        %1198 = vmatprep.subr.bf16.mxu0 %v1065
        %1199 = vmatpush2.bf16.msra.mxu0 %v1064
        %1200 = vmatprep.subr.bf16.mxu0 %v1063
        %1201 = vmatpush2.bf16.msra.mxu0 %v1062
        %1202 = vmatprep.subr.bf16.mxu0 %v1061
        %1203 = vmatpush2.bf16.msra.mxu0 %v1060
        %1204 = vmatprep.mubr.bf16.mxu0 %v845
        %1205 = vmatmul.mubr.bf16.gmra.mxu0 %v844
        %v1206 = vpop.f32.mrf.mxu0
        %v1207 = vadd.f32 %v831, %v1206
        %v1208 = vpop.f32.mrf.mxu0
        %v1209 = vadd.f32 %v835, %v1208
        %v1210 = vpop.f32.mrf.mxu0
        %v1211 = vpop.f32.mrf.mxu0
        %1212 = vdwg.mxu0
        %1213 = vmatprep.subr.bf16.mxu0 %v1091
        %1214 = vmatpush1.bf16.msra.mxu0 %v1090
        %1215 = vmatprep.subr.bf16.mxu0 %v1089
        %1216 = vmatpush1.bf16.msra.mxu0 %v1088
        %1217 = vmatprep.subr.bf16.mxu0 %v1087
        %1218 = vmatpush1.bf16.msra.mxu0 %v1086
        %1219 = vmatprep.subr.bf16.mxu0 %v1085
        %1220 = vmatpush1.bf16.msra.mxu0 %v1084
        %1221 = vmatprep.subr.bf16.mxu0 %v1083
        %1222 = vmatpush1.bf16.msra.mxu0 %v1082
        %1223 = vmatprep.subr.bf16.mxu0 %v1081
        %1224 = vmatpush1.bf16.msra.mxu0 %v1080
        %1225 = vmatprep.subr.bf16.mxu0 %v1079
        %1226 = vmatpush1.bf16.msra.mxu0 %v1078
        %1227 = vmatprep.subr.bf16.mxu0 %v1077
        %1228 = vmatpush1.bf16.msra.mxu0 %v1076
        %1229 = vmatprep.subr.bf16.mxu0 %v1107
        %1230 = vmatpush2.bf16.msra.mxu0 %v1106
        %1231 = vmatprep.subr.bf16.mxu0 %v1105
        %1232 = vmatpush2.bf16.msra.mxu0 %v1104
        %1233 = vmatprep.subr.bf16.mxu0 %v1103
        %1234 = vmatpush2.bf16.msra.mxu0 %v1102
        %1235 = vmatprep.subr.bf16.mxu0 %v1101
        %1236 = vmatpush2.bf16.msra.mxu0 %v1100
        %1237 = vmatprep.subr.bf16.mxu0 %v1099
        %1238 = vmatpush2.bf16.msra.mxu0 %v1098
        %1239 = vmatprep.subr.bf16.mxu0 %v1097
        %1240 = vmatpush2.bf16.msra.mxu0 %v1096
        %1241 = vmatprep.subr.bf16.mxu0 %v1095
        %1242 = vmatpush2.bf16.msra.mxu0 %v1094
        %1243 = vmatprep.subr.bf16.mxu0 %v1093
        %1244 = vmatpush2.bf16.msra.mxu0 %v1092
        %1245 = vmatprep.mubr.bf16.mxu0 %v847
        %1246 = vmatmul.mubr.bf16.gmra.mxu0 %v846
        %v1247 = vpop.f32.mrf.mxu0
        %v1248 = vadd.f32 %v1207, %v1247
        %v1249 = vpop.f32.mrf.mxu0
        %v1250 = vadd.f32 %v1209, %v1249
        %v1251 = vpop.f32.mrf.mxu0
        %v1252 = vpop.f32.mrf.mxu0
        %1253 = vdwg.mxu0
        %v1254 = vxor.u32 %v1248, 2147483648
        %v1255 = vxor.u32 %v1250, 2147483648
        %v1256 = vmul.f32 %v1254, 1.442695
        %v1257 = vpow.pop %v1256
        %v1258 = vmul.f32 %v1255, 1.442695
        %v1259 = vpow.pop %v1258
        %v1260 = vadd.f32 %v1257, 1.0
        %v1261 = vadd.f32 %v1259, 1.0
        %v1262 = vrcp.pop %v1260
        %v1263 = vmul.f32 1.0, %v1262
        %v1264 = vrcp.pop %v1261
        %v1265 = vmul.f32 1.0, %v1264
        %v1266 = vmul.f32 %v1248, %v1263
        %v1267 = vmul.f32 %v1250, %v1265
        %1268 = vst [vmem:[%s310] sm:$0xff] %v1266
        %1269 = vst [vmem:[%s310 + $0x8] sm:$0xff] %v1267
        %s1270 = sand.u32 %s166, 1
        %s1271 = scalar_lea.sflag [#allocation5], %s1270
        %s1272 = sand.u32 %s166, 1
        %s1273 = smul.addr %s1272, 16
        %s1274 = scalar_lea.vmem [#allocation9], %s1273
        // Predicated region
        $region61: #{tpu_custom_call.1} parent=43 // pred_check
          %p1275 = pneg %p176
        $region62: #{tpu_custom_call.1} parent=43 // pred_check_branch
          %1277 = sbr.rel (%p1275) target = $region64
        $region63: #{tpu_custom_call.1} parent=43 // pred_region
          %s1278 = smul.u32 2, %s22
          %s1280 = ssub.s32 256, 256
          %1281 = vsyncadd %s1271, %s1280
          %s1282 = smul.addr %s1278, 128
          %s1283 = scalar_lea.hbm %s6, %s1282
          %s1285 = sshll.u32 %s1274, 4
          %s1286 = int_to_ptr.vmem [resolvable:$true] %s1285
          %1288 = dma.vmem_to_hbm [thread:$0]  %s1286, 256, %s1283, %s1271
        $region64: #{tpu_custom_call.1} parent=43 // pred_fallthru
          _
      $region44: #{tpu_custom_call.1} parent=5 // pred_fallthru
        _
      %p1289 = scmp.le.s32.totalorder 2, %s17
      // Predicated region
      $region65: #{tpu_custom_call.1} parent=5 // pred_check
        %p1290 = pneg %p1289
      $region66: #{tpu_custom_call.1} parent=5 // pred_check_branch
        %1292 = sbr.rel (%p1290) target = $region68
      $region67: #{tpu_custom_call.1} parent=5 // pred_region
        %s1293 = ssub.s32 %s17, 2
        // Predicated region
        $region69: #{tpu_custom_call.1} parent=67 // pred_check
          %p1294 = pneg %p182
        $region70: #{tpu_custom_call.1} parent=67 // pred_check_branch
          %1296 = sbr.rel (%p1294) target = $region72
        $region71: #{tpu_custom_call.1} parent=67 // pred_region
          %s1297 = sand.u32 %s167, 1
          %s1298 = scalar_lea.sflag [#allocation5], %s1297
          %s1299 = sand.u32 %s167, 1
          %s1300 = smul.addr %s1299, 16
          %s1301 = scalar_lea.vmem [#allocation9], %s1300
          %1302 = dma.done %s1298, 256
        $region72: #{tpu_custom_call.1} parent=67 // pred_fallthru
          _
      $region68: #{tpu_custom_call.1} parent=5 // pred_fallthru
        _
    $region6: #{tpu_custom_call.1} parent=1 // loop_footer
      %s21 = sadd.s32 1, %s17
    $region7: #{tpu_custom_call.1} parent=1 // loop_footer_branch
      %16 = sbr.rel target = $region3
    $region8: #{tpu_custom_call.1} parent=1 // loop_exit
      _
    %1303 = vsyncpa [#allocation4], 1
    %s1304 = scalar_lea.sflag [#allocation4], 1
    %1305 = vsyncpa %s1304, 1
    %1306 = vsyncpa [#allocation7], 1
    %1307 = vsyncpa [#allocation5], 1
    %s1308 = scalar_lea.sflag [#allocation5], 1
    %1309 = vsyncpa %s1308, 1

</llo_original>
